<compile_context>
chip_gen: v7x
topology: tpu7x:2x2x1
jax: 0.10.0
libtpu: 0.0.40
codegen_flags: <defaults>
</compile_context>

<pallas_src>
import jax
import jax.numpy as jnp
from jax import lax
from jax.experimental import pallas as pl
from jax.experimental.pallas import tpu as pltpu


def gc_block_kernel(x_ref, w1_ref, fc1wT_ref, small_ref, fc2wT_ref, fc2b_ref,
                    o_ref):
    # x_ref block: (NB, C, HW)
    x = x_ref[...]
    xf = x.astype(jnp.float32)
    nb, C, HW = xf.shape

    # ---- spatial pool -------------------------------------------------------
    # logits[n, hw] = sum_c w1[c] * x[n, c, hw]  (MXU batched (1,C)@(C,HW))
    # conv1x1 bias omitted: softmax over HW is invariant to a per-sample scalar.
    w1b = jnp.broadcast_to(w1_ref[...].reshape(1, 1, C), (nb, 1, C))
    logits = jnp.einsum('nkc,nch->nkh', w1b, xf,
                        preferred_element_type=jnp.float32)        # (NB,1,HW)
    m = jnp.max(logits, axis=-1, keepdims=True)                    # (NB,1,1)
    e = jnp.exp(logits - m)                                        # (NB,1,HW)
    denom = jnp.sum(e, axis=-1, keepdims=True)                     # (NB,1,1)

    # un-normalized context on the MXU (never materialize p = e/denom),
    # then scale by the per-sample reciprocal (normalization commutes).
    ctx3 = jnp.einsum('nch,nkh->nck', xf, e,
                      preferred_element_type=jnp.float32)          # (NB,C,1)
    ctx = (ctx3 * pl.reciprocal(denom))[:, :, 0]                   # (NB,C)

    # ---- MLP on all NB contexts at once: fc1 -> LN -> ReLU -> fc2 ----------
    fc1b = small_ref[0:1, :]                                       # (1,Cr)
    ln_g = small_ref[1:2, :]                                       # (1,Cr)
    ln_b = small_ref[2:3, :]                                       # (1,Cr)

    y1 = jnp.dot(ctx, fc1wT_ref[...],
                 preferred_element_type=jnp.float32) + fc1b        # (NB,Cr)
    mean = jnp.mean(y1, axis=-1, keepdims=True)
    var = jnp.mean((y1 - mean) ** 2, axis=-1, keepdims=True)
    y1n = (y1 - mean) * lax.rsqrt(var + 1e-5)                      # eps = 1e-5
    y1n = y1n * ln_g + ln_b
    h = jnp.maximum(y1n, 0.0)
    y2 = jnp.dot(h, fc2wT_ref[...],
                 preferred_element_type=jnp.float32) + fc2b_ref[...]  # (NB,C)

    # ---- residual add (broadcast channel vector over HW lanes) -------------
    o_ref[...] = (xf + y2[:, :, None]).astype(o_ref.dtype)


def gc_block_pallas(x, params):
    """x: (N, C, H, W) float32/bfloat16 (NCHW, like the PyTorch module)."""
    N, C, H, W = x.shape
    HW = H * W
    w1, b1, fc1w, fc1b, ln_g, ln_b, fc2w, fc2b = params
    Cr = fc1w.shape[0]
    del b1  # softmax over HW is invariant to the conv1x1 bias -> exact no-op

    dtype = x.dtype
    itemsize = jnp.dtype(dtype).itemsize
    x2 = x.reshape(N, C, HW)

    # Samples per block: target ~2 MiB per x block (keeps in+out double-buffer
    # well under v7x's scoped VMEM), cap at 128, and keep >= 2 grid steps when
    # N >= 2 so both v7x TensorCores get work.
    per_sample = C * HW * itemsize
    nb = int(max(1, min(2 * 1024 * 1024 // max(per_sample, 1),
                        128, pl.cdiv(N, 2))))
    n_blocks = pl.cdiv(N, nb)
    N_pad = n_blocks * nb
    if N_pad != N:
        x2 = jnp.pad(x2, ((0, N_pad - N), (0, 0), (0, 0)))

    # Host-side parameter packing: transposed weights + fused small vectors.
    w1_row = w1.reshape(1, C).astype(jnp.float32)
    fc1wT = fc1w.reshape(Cr, C).T.astype(jnp.float32)              # (C, Cr)
    small = jnp.stack([fc1b.reshape(Cr), ln_g.reshape(Cr),
                       ln_b.reshape(Cr)], axis=0).astype(jnp.float32)  # (3, Cr)
    fc2wT = fc2w.reshape(C, Cr).T.astype(jnp.float32)              # (Cr, C)
    fc2b_row = fc2b.reshape(1, C).astype(jnp.float32)

    out = pl.pallas_call(
        gc_block_kernel,
        out_shape=jax.ShapeDtypeStruct((N_pad, C, HW), dtype),
        grid=(n_blocks,),
        in_specs=[
            pl.BlockSpec((nb, C, HW), lambda i: (i, 0, 0)),  # x block
            pl.BlockSpec((1, C),  lambda i: (0, 0)),         # conv1x1 weight
            pl.BlockSpec((C, Cr), lambda i: (0, 0)),         # fc1 weight^T
            pl.BlockSpec((3, Cr), lambda i: (0, 0)),         # [fc1b; ln_g; ln_b]
            pl.BlockSpec((Cr, C), lambda i: (0, 0)),         # fc2 weight^T
            pl.BlockSpec((1, C),  lambda i: (0, 0)),         # fc2 bias
        ],
        out_specs=pl.BlockSpec((nb, C, HW), lambda i: (i, 0, 0)),
        compiler_params=pltpu.CompilerParams(
            dimension_semantics=("parallel",),
            vmem_limit_bytes=32 * 1024 * 1024),
    )(x2, w1_row, fc1wT, small, fc2wT, fc2b_row)

    return out[:N].reshape(N, C, H, W)


def gc_block_ref(x, params):
    """Pure-JAX reference mirroring the PyTorch forward (including b1)."""
    N, C, H, W = x.shape
    HW = H * W
    w1, b1, fc1w, fc1b, ln_g, ln_b, fc2w, fc2b = params
    Cr = fc1w.shape[0]

    xf = x.reshape(N, C, HW)
    logits = jnp.einsum("nck,c->nk", xf, w1.reshape(C)) + b1.reshape(())
    p = jax.nn.softmax(logits, axis=-1)                        # (N, HW)
    ctx = jnp.einsum("nck,nk->nc", xf, p)                      # (N, C)
    y1 = ctx @ fc1w.reshape(Cr, C).T + fc1b.reshape(Cr)        # (N, Cr)
    mean = y1.mean(-1, keepdims=True)
    var = ((y1 - mean) ** 2).mean(-1, keepdims=True)
    y1n = (y1 - mean) / jnp.sqrt(var + 1e-5)
    y1n = y1n * ln_g.reshape(Cr) + ln_b.reshape(Cr)
    h = jnp.maximum(y1n, 0.0)
    y2 = h @ fc2w.reshape(C, Cr).T + fc2b.reshape(C)           # (N, C)
    return x + y2[:, :, None, None]


def make_params(key, channels, ratio=4):
    C = channels
    Cr = C // ratio
    ks = jax.random.split(key, 8)
    s = 0.1
    w1   = (s * jax.random.normal(ks[0], (C, 1))).astype(jnp.float32)
    b1   = (s * jax.random.normal(ks[1], (1, 1))).astype(jnp.float32)
    fc1w = (s * jax.random.normal(ks[2], (Cr, C))).astype(jnp.float32)
    fc1b = (s * jax.random.normal(ks[3], (Cr, 1))).astype(jnp.float32)
    ln_g = (1.0 + s * jax.random.normal(ks[4], (Cr, 1))).astype(jnp.float32)
    ln_b = (s * jax.random.normal(ks[5], (Cr, 1))).astype(jnp.float32)
    fc2w = (s * jax.random.normal(ks[6], (C, Cr))).astype(jnp.float32)
    fc2b = (s * jax.random.normal(ks[7], (C, 1))).astype(jnp.float32)
    return (w1, b1, fc1w, fc1b, ln_g, ln_b, fc2w, fc2b)


if __name__ == "__main__":
    N, C, H, W = 2, 16, 16, 16
    ratio = 4

    key = jax.random.PRNGKey(0)
    kx, kp = jax.random.split(key)
    x = jax.random.normal(kx, (N, C, H, W), dtype=jnp.float32)
    params = make_params(kp, C, ratio)

    out = gc_block_pallas(x, params)
    out = jax.block_until_ready(out)

    ref = gc_block_ref(x, params)
    assert out.shape == (N, C, H, W)
    assert jnp.allclose(out, ref, atol=1e-4, rtol=1e-4), (
        f"max abs err {jnp.max(jnp.abs(out - ref))}")

    print("KERNEL_OK")
</pallas_src>

<mosaic_0001>
module attributes {stable_mosaic.version = 11 : i64} {
  func.func @gc_block_kernel(%arg0: i32, %arg1: memref<1x16x256xf32, #tpu.memory_space<vmem>>, %arg2: memref<1x16xf32, #tpu.memory_space<vmem>>, %arg3: memref<16x4xf32, #tpu.memory_space<vmem>>, %arg4: memref<3x4xf32, #tpu.memory_space<vmem>>, %arg5: memref<4x16xf32, #tpu.memory_space<vmem>>, %arg6: memref<1x16xf32, #tpu.memory_space<vmem>>, %arg7: memref<1x16x256xf32, #tpu.memory_space<vmem>>) attributes {dimension_semantics = [#tpu.dimension_semantics<parallel>], iteration_bounds = array<i64: 2>, scalar_prefetch = 0 : i64, scratch_operands = 0 : i64, tpu.core_type = #tpu.core_type<tc>, window_params = [{transform_indices = @transform_0, window_bounds = array<i64: 1, 16, 256>}, {pipeline_mode = #tpu.pipeline_mode<synchronous>, transform_indices = @transform_1, window_bounds = array<i64: 1, 16>}, {pipeline_mode = #tpu.pipeline_mode<synchronous>, transform_indices = @transform_2, window_bounds = array<i64: 16, 4>}, {pipeline_mode = #tpu.pipeline_mode<synchronous>, transform_indices = @transform_3, window_bounds = array<i64: 3, 4>}, {pipeline_mode = #tpu.pipeline_mode<synchronous>, transform_indices = @transform_4, window_bounds = array<i64: 4, 16>}, {pipeline_mode = #tpu.pipeline_mode<synchronous>, transform_indices = @transform_5, window_bounds = array<i64: 1, 16>}, {transform_indices = @transform_6, window_bounds = array<i64: 1, 16, 256>}]} {
    %c0 = arith.constant 0 : index
    %c0_0 = arith.constant 0 : index
    %c0_1 = arith.constant 0 : index
    %0 = vector.load %arg1[%c0, %c0_0, %c0_1] : memref<1x16x256xf32, #tpu.memory_space<vmem>>, vector<1x16x256xf32>
    %c0_2 = arith.constant 0 : index
    %c0_3 = arith.constant 0 : index
    %1 = vector.load %arg2[%c0_2, %c0_3] : memref<1x16xf32, #tpu.memory_space<vmem>>, vector<1x16xf32>
    %2 = vector.shape_cast %1 : vector<1x16xf32> to vector<1x1x16xf32>
    "tpu.trace_start"() <{level = 10 : i32, message = "nkc,nch->nkh"}> : () -> ()
    %cst = arith.constant dense<0.000000e+00> : vector<1x1x256xf32>
    %3 = tpu.matmul %2, %0, %cst {dimension_numbers = #tpu.dot_dimension_numbers<[2], [1], [1], [2], [0, 0, 0, 1, 1, 2], [0], [0]>} : vector<1x1x16xf32>, vector<1x16x256xf32>, vector<1x1x256xf32> -> vector<1x1x256xf32>
    "tpu.trace_stop"() : () -> ()
    %cst_4 = arith.constant dense<0xFF800000> : vector<1x1xf32>
    %4 = vector.multi_reduction <maximumf>, %3, %cst_4 [2] : vector<1x1x256xf32> to vector<1x1xf32>
    %5 = vector.shape_cast %4 : vector<1x1xf32> to vector<1x1x1xf32>
    %6 = vector.broadcast %5 : vector<1x1x1xf32> to vector<1x1x256xf32>
    %7 = arith.subf %3, %6 : vector<1x1x256xf32>
    %8 = math.exp %7 : vector<1x1x256xf32>
    %cst_5 = arith.constant dense<0.000000e+00> : vector<1x1xf32>
    %9 = vector.multi_reduction <add>, %8, %cst_5 [2] : vector<1x1x256xf32> to vector<1x1xf32>
    %10 = vector.shape_cast %9 : vector<1x1xf32> to vector<1x1x1xf32>
    "tpu.trace_start"() <{level = 10 : i32, message = "nch,nkh->nck"}> : () -> ()
    %cst_6 = arith.constant dense<0.000000e+00> : vector<1x16x1xf32>
    %11 = tpu.matmul %0, %8, %cst_6 {dimension_numbers = #tpu.dot_dimension_numbers<[2], [2], [1], [1], [0, 0, 0, 1, 1, 1], [0], [0]>} : vector<1x16x256xf32>, vector<1x1x256xf32>, vector<1x16x1xf32> -> vector<1x16x1xf32>
    "tpu.trace_stop"() : () -> ()
    %12 = tpu.reciprocal %10 : vector<1x1x1xf32> -> vector<1x1x1xf32>
    %13 = vector.broadcast %12 : vector<1x1x1xf32> to vector<1x16x1xf32>
    %14 = arith.mulf %11, %13 : vector<1x16x1xf32>
    %15 = vector.shape_cast %14 : vector<1x16x1xf32> to vector<1x16xf32>
    %c0_7 = arith.constant 0 : index
    %c0_8 = arith.constant 0 : index
    %16 = vector.load %arg4[%c0_7, %c0_8] : memref<3x4xf32, #tpu.memory_space<vmem>>, vector<1x4xf32>
    %c1 = arith.constant 1 : index
    %c0_9 = arith.constant 0 : index
    %17 = vector.load %arg4[%c1, %c0_9] : memref<3x4xf32, #tpu.memory_space<vmem>>, vector<1x4xf32>
    %c2 = arith.constant 2 : index
    %c0_10 = arith.constant 0 : index
    %18 = vector.load %arg4[%c2, %c0_10] : memref<3x4xf32, #tpu.memory_space<vmem>>, vector<1x4xf32>
    %c0_11 = arith.constant 0 : index
    %c0_12 = arith.constant 0 : index
    %19 = vector.load %arg3[%c0_11, %c0_12] : memref<16x4xf32, #tpu.memory_space<vmem>>, vector<16x4xf32>
    %cst_13 = arith.constant dense<0.000000e+00> : vector<1x4xf32>
    %20 = tpu.matmul %15, %19, %cst_13 {dimension_numbers = #tpu.dot_dimension_numbers<[1], [0], [0], [1], [0, 0, 1, 1], [], []>} : vector<1x16xf32>, vector<16x4xf32>, vector<1x4xf32> -> vector<1x4xf32>
    %21 = arith.addf %20, %16 : vector<1x4xf32>
    %cst_14 = arith.constant dense<0.000000e+00> : vector<1xf32>
    %22 = vector.multi_reduction <add>, %21, %cst_14 [1] : vector<1x4xf32> to vector<1xf32>
    %23 = vector.shape_cast %22 : vector<1xf32> to vector<1x1xf32>
    %cst_15 = arith.constant 4.000000e+00 : f32
    %24 = vector.broadcast %cst_15 : f32 to vector<1x1xf32>
    %25 = arith.divf %23, %24 : vector<1x1xf32>
    %26 = vector.broadcast %25 : vector<1x1xf32> to vector<1x4xf32>
    %27 = arith.subf %21, %26 : vector<1x4xf32>
    %28 = arith.mulf %27, %27 : vector<1x4xf32>
    %cst_16 = arith.constant dense<0.000000e+00> : vector<1xf32>
    %29 = vector.multi_reduction <add>, %28, %cst_16 [1] : vector<1x4xf32> to vector<1xf32>
    %30 = vector.shape_cast %29 : vector<1xf32> to vector<1x1xf32>
    %cst_17 = arith.constant 4.000000e+00 : f32
    %31 = vector.broadcast %cst_17 : f32 to vector<1x1xf32>
    %32 = arith.divf %30, %31 : vector<1x1xf32>
    %33 = vector.broadcast %25 : vector<1x1xf32> to vector<1x4xf32>
    %34 = arith.subf %21, %33 : vector<1x4xf32>
    %cst_18 = arith.constant 9.99999974E-6 : f32
    %35 = vector.broadcast %cst_18 : f32 to vector<1x1xf32>
    %36 = arith.addf %32, %35 : vector<1x1xf32>
    %37 = math.rsqrt %36 : vector<1x1xf32>
    %38 = vector.broadcast %37 : vector<1x1xf32> to vector<1x4xf32>
    %39 = arith.mulf %34, %38 : vector<1x4xf32>
    %40 = arith.mulf %39, %17 : vector<1x4xf32>
    %41 = arith.addf %40, %18 : vector<1x4xf32>
    %cst_19 = arith.constant 0.000000e+00 : f32
    %42 = vector.broadcast %cst_19 : f32 to vector<1x4xf32>
    %43 = arith.maximumf %41, %42 : vector<1x4xf32>
    %c0_20 = arith.constant 0 : index
    %c0_21 = arith.constant 0 : index
    %44 = vector.load %arg5[%c0_20, %c0_21] : memref<4x16xf32, #tpu.memory_space<vmem>>, vector<4x16xf32>
    %cst_22 = arith.constant dense<0.000000e+00> : vector<1x16xf32>
    %45 = tpu.matmul %43, %44, %cst_22 {dimension_numbers = #tpu.dot_dimension_numbers<[1], [0], [0], [1], [0, 0, 1, 1], [], []>} : vector<1x4xf32>, vector<4x16xf32>, vector<1x16xf32> -> vector<1x16xf32>
    %c0_23 = arith.constant 0 : index
    %c0_24 = arith.constant 0 : index
    %46 = vector.load %arg6[%c0_23, %c0_24] : memref<1x16xf32, #tpu.memory_space<vmem>>, vector<1x16xf32>
    %47 = arith.addf %45, %46 : vector<1x16xf32>
    %48 = vector.shape_cast %47 : vector<1x16xf32> to vector<1x16x1xf32>
    %49 = vector.broadcast %48 : vector<1x16x1xf32> to vector<1x16x256xf32>
    %50 = arith.addf %0, %49 : vector<1x16x256xf32>
    %c0_25 = arith.constant 0 : index
    %c0_26 = arith.constant 0 : index
    %c0_27 = arith.constant 0 : index
    %51 = vector.load %arg7[%c0_25, %c0_26, %c0_27] : memref<1x16x256xf32, #tpu.memory_space<vmem>>, vector<1x16x256xf32>
    tpu.vector_store %arg7[%c0_25, %c0_26, %c0_27], %50 {strides = array<i32>} : memref<1x16x256xf32, #tpu.memory_space<vmem>>, vector<1x16x256xf32>,
    return
  }
  func.func @transform_0(%arg0: i32) -> (i32, i32, i32) {
    %c0_i32 = arith.constant 0 : i32
    %c0_i32_0 = arith.constant 0 : i32
    %c0_i32_1 = arith.constant 0 : i32
    return %arg0, %c0_i32, %c0_i32_0 : i32, i32, i32
  }
  func.func @transform_1(%arg0: i32) -> (i32, i32) {
    %c0_i32 = arith.constant 0 : i32
    %c0_i32_0 = arith.constant 0 : i32
    %c0_i32_1 = arith.constant 0 : i32
    return %c0_i32, %c0_i32_0 : i32, i32
  }
  func.func @transform_2(%arg0: i32) -> (i32, i32) {
    %c0_i32 = arith.constant 0 : i32
    %c0_i32_0 = arith.constant 0 : i32
    %c0_i32_1 = arith.constant 0 : i32
    return %c0_i32, %c0_i32_0 : i32, i32
  }
  func.func @transform_3(%arg0: i32) -> (i32, i32) {
    %c0_i32 = arith.constant 0 : i32
    %c0_i32_0 = arith.constant 0 : i32
    %c0_i32_1 = arith.constant 0 : i32
    return %c0_i32, %c0_i32_0 : i32, i32
  }
  func.func @transform_4(%arg0: i32) -> (i32, i32) {
    %c0_i32 = arith.constant 0 : i32
    %c0_i32_0 = arith.constant 0 : i32
    %c0_i32_1 = arith.constant 0 : i32
    return %c0_i32, %c0_i32_0 : i32, i32
  }
  func.func @transform_5(%arg0: i32) -> (i32, i32) {
    %c0_i32 = arith.constant 0 : i32
    %c0_i32_0 = arith.constant 0 : i32
    %c0_i32_1 = arith.constant 0 : i32
    return %c0_i32, %c0_i32_0 : i32, i32
  }
  func.func @transform_6(%arg0: i32) -> (i32, i32, i32) {
    %c0_i32 = arith.constant 0 : i32
    %c0_i32_0 = arith.constant 0 : i32
    %c0_i32_1 = arith.constant 0 : i32
    return %arg0, %c0_i32, %c0_i32_0 : i32, i32, i32
  }
}

</mosaic_0001>

<llo_original>
// kernel: tpu_custom_call.1
$region0: #{tpu_custom_call.1}
  #allocation0 [shape = 'u32[]', space=smem, size = 0x4, offset = 0x4, fixed_abs, tag = 'smem constant byte address 0x4 - core index']
  #allocation1 [shape = 'u32[144,128]{1,0:T(1,128)}', space=vmem, size = 0x12000, scoped, tag = 'internal scratch']
  %s0 = inlined_call_operand.hbm [shape: f32[2,16,256], index: 0, kind: input, shape index: {}]
  %s1 = inlined_call_operand.vmem [shape: f32[1,16], index: 1, kind: input, shape index: {}]
  %s2 = inlined_call_operand.vmem [shape: f32[16,4], index: 2, kind: input, shape index: {}]
  %s3 = inlined_call_operand.vmem [shape: f32[3,4], index: 3, kind: input, shape index: {}]
  %s4 = inlined_call_operand.vmem [shape: f32[4,16], index: 4, kind: input, shape index: {}]
  %s5 = inlined_call_operand.vmem [shape: f32[1,16], index: 5, kind: input, shape index: {}]
  %s6 = inlined_call_operand.hbm [shape: f32[2,16,256], index: 6, kind: output, shape index: {}]
  %s7 = sld [smem:[#allocation0]]
  $region61: #{tpu_custom_call.1} parent=0
    _
  %s9 = ssub.s32 1, %s7
  %s10 = scalar_select 0, %s9, %s7
  $region1: #{tpu_custom_call.1} parent=0
    #allocation2 [shape = 'u8[32768]{0}', space=vmem, size = 0x8000, scoped, tag = 'input window, operand 0']
    #allocation3 [shape = 's32[2]{0}', space=sflag, size = 0x8, scoped, tag = 'scoped memory for tpu_custom_call.1']
    #allocation4 [shape = 's32[2]{0}', space=sflag, size = 0x8, scoped, tag = 'scoped memory for tpu_custom_call.1']
    #allocation5 [shape = 'u8[32768]{0}', space=vmem, size = 0x8000, scoped, tag = 'output window, operand 0']
    %11 = vsyncpa [#allocation3], 0
    %s12 = scalar_lea.sflag [#allocation3], 1
    %13 = vsyncpa %s12, 0
    %14 = vsyncpa [#allocation4], 0
    %s15 = scalar_lea.sflag [#allocation4], 1
    %16 = vsyncpa %s15, 0
    loop: start=0, step=1, limit=4
    $region2: #{tpu_custom_call.1} parent=1 // loop_pre_header
      _
    $region3: #{tpu_custom_call.1} parent=1 // loop_header
      %s18 = sphi 0, %s22
      %p19 = scmp.ge.s32.totalorder %s18, 4
      %s28 = sphi 0, %s30
      %s31 = sphi 0, %s28
      %s32 = sphi 0, %s31
      %s48 = sphi 0, %s32
      %s52 = sphi 0, %s52
      %s54 = sphi 0, %s52
      %s55 = sphi 0, %s54
      %s69 = sphi 0, %s55
      %s73 = sphi 0, %s73
      %s75 = sphi 0, %s73
      %s76 = sphi 0, %s75
      %s90 = sphi 0, %s76
      %s94 = sphi 0, %s94
      %s96 = sphi 0, %s94
      %s97 = sphi 0, %s96
      %s111 = sphi 0, %s97
      %s115 = sphi 0, %s115
      %s117 = sphi 0, %s115
      %s118 = sphi 0, %s117
      %s132 = sphi 0, %s118
      %s136 = sphi 0, %s136
      %s138 = sphi 0, %s136
      %s139 = sphi 0, %s138
      %s153 = sphi 0, %s139
      %s159 = sphi 0, %s161
      %s162 = sphi 0, %s159
      %s163 = sphi 0, %s162
      %s179 = sphi 0, %s163
    $region4: #{tpu_custom_call.1} parent=1 // loop_header_branch
      %21 = sbr.rel (%p19) target = $region8
    $region5: #{tpu_custom_call.1} parent=1 // loop_body
      %s23 = ssub.s32 %s18, 1
      %s24 = ssub.s32 %s18, 2
      %s25 = sadd.s32 %s18, 1
      %s26 = ssub.s32 %s18, %s25
      %p27 = scmp.eq.s32.totalorder %s26, 0
      %s29 = sadd.s32 %s28, 1
      %s30 = scalar_select %p27, %s28, %s29
      %p33 = pneg %p27
      %p34 = scmp.eq.s32.totalorder %s18, 1
      %p35 = por %p33, %p34
      %p36 = scmp.ne.s32.totalorder %s28, %s31
      %p37 = scmp.eq.s32.totalorder %s18, 0
      %p38 = por %p36, %p37
      %p39 = scmp.ne.s32.totalorder %s28, %s31
      %p40 = scmp.eq.s32.totalorder %s23, 1
      %p41 = por %p39, %p40
      %p42 = scmp.ne.s32.totalorder %s31, %s32
      %p43 = scmp.eq.s32.totalorder %s23, 0
      %p44 = por %p42, %p43
      %p45 = scmp.ne.s32.totalorder %s31, %s32
      %p46 = scmp.eq.s32.totalorder %s24, 1
      %p47 = por %p45, %p46
      %p49 = scmp.ne.s32.totalorder %s32, %s48
      %p50 = scmp.eq.s32.totalorder %s24, 0
      %p51 = por %p49, %p50
      %s53 = sadd.s32 %s52, 1
      %p56 = scmp.eq.s32.totalorder %s18, 1
      %p57 = scmp.ne.s32.totalorder %s52, %s54
      %p58 = scmp.eq.s32.totalorder %s18, 0
      %p59 = por %p57, %p58
      %p60 = scmp.ne.s32.totalorder %s52, %s54
      %p61 = scmp.eq.s32.totalorder %s23, 1
      %p62 = por %p60, %p61
      %p63 = scmp.ne.s32.totalorder %s54, %s55
      %p64 = scmp.eq.s32.totalorder %s23, 0
      %p65 = por %p63, %p64
      %p66 = scmp.ne.s32.totalorder %s54, %s55
      %p67 = scmp.eq.s32.totalorder %s24, 1
      %p68 = por %p66, %p67
      %p70 = scmp.ne.s32.totalorder %s55, %s69
      %p71 = scmp.eq.s32.totalorder %s24, 0
      %p72 = por %p70, %p71
      %s74 = sadd.s32 %s73, 1
      %p77 = scmp.eq.s32.totalorder %s18, 1
      %p78 = scmp.ne.s32.totalorder %s73, %s75
      %p79 = scmp.eq.s32.totalorder %s18, 0
      %p80 = por %p78, %p79
      %p81 = scmp.ne.s32.totalorder %s73, %s75
      %p82 = scmp.eq.s32.totalorder %s23, 1
      %p83 = por %p81, %p82
      %p84 = scmp.ne.s32.totalorder %s75, %s76
      %p85 = scmp.eq.s32.totalorder %s23, 0
      %p86 = por %p84, %p85
      %p87 = scmp.ne.s32.totalorder %s75, %s76
      %p88 = scmp.eq.s32.totalorder %s24, 1
      %p89 = por %p87, %p88
      %p91 = scmp.ne.s32.totalorder %s76, %s90
      %p92 = scmp.eq.s32.totalorder %s24, 0
      %p93 = por %p91, %p92
      %s95 = sadd.s32 %s94, 1
      %p98 = scmp.eq.s32.totalorder %s18, 1
      %p99 = scmp.ne.s32.totalorder %s94, %s96
      %p100 = scmp.eq.s32.totalorder %s18, 0
      %p101 = por %p99, %p100
      %p102 = scmp.ne.s32.totalorder %s94, %s96
      %p103 = scmp.eq.s32.totalorder %s23, 1
      %p104 = por %p102, %p103
      %p105 = scmp.ne.s32.totalorder %s96, %s97
      %p106 = scmp.eq.s32.totalorder %s23, 0
      %p107 = por %p105, %p106
      %p108 = scmp.ne.s32.totalorder %s96, %s97
      %p109 = scmp.eq.s32.totalorder %s24, 1
      %p110 = por %p108, %p109
      %p112 = scmp.ne.s32.totalorder %s97, %s111
      %p113 = scmp.eq.s32.totalorder %s24, 0
      %p114 = por %p112, %p113
      %s116 = sadd.s32 %s115, 1
      %p119 = scmp.eq.s32.totalorder %s18, 1
      %p120 = scmp.ne.s32.totalorder %s115, %s117
      %p121 = scmp.eq.s32.totalorder %s18, 0
      %p122 = por %p120, %p121
      %p123 = scmp.ne.s32.totalorder %s115, %s117
      %p124 = scmp.eq.s32.totalorder %s23, 1
      %p125 = por %p123, %p124
      %p126 = scmp.ne.s32.totalorder %s117, %s118
      %p127 = scmp.eq.s32.totalorder %s23, 0
      %p128 = por %p126, %p127
      %p129 = scmp.ne.s32.totalorder %s117, %s118
      %p130 = scmp.eq.s32.totalorder %s24, 1
      %p131 = por %p129, %p130
      %p133 = scmp.ne.s32.totalorder %s118, %s132
      %p134 = scmp.eq.s32.totalorder %s24, 0
      %p135 = por %p133, %p134
      %s137 = sadd.s32 %s136, 1
      %p140 = scmp.eq.s32.totalorder %s18, 1
      %p141 = scmp.ne.s32.totalorder %s136, %s138
      %p142 = scmp.eq.s32.totalorder %s18, 0
      %p143 = por %p141, %p142
      %p144 = scmp.ne.s32.totalorder %s136, %s138
      %p145 = scmp.eq.s32.totalorder %s23, 1
      %p146 = por %p144, %p145
      %p147 = scmp.ne.s32.totalorder %s138, %s139
      %p148 = scmp.eq.s32.totalorder %s23, 0
      %p149 = por %p147, %p148
      %p150 = scmp.ne.s32.totalorder %s138, %s139
      %p151 = scmp.eq.s32.totalorder %s24, 1
      %p152 = por %p150, %p151
      %p154 = scmp.ne.s32.totalorder %s139, %s153
      %p155 = scmp.eq.s32.totalorder %s24, 0
      %p156 = por %p154, %p155
      %s157 = ssub.s32 %s18, %s25
      %p158 = scmp.eq.s32.totalorder %s157, 0
      %s160 = sadd.s32 %s159, 1
      %s161 = scalar_select %p158, %s159, %s160
      %p164 = pneg %p158
      %p165 = scmp.eq.s32.totalorder %s18, 1
      %p166 = por %p164, %p165
      %p167 = scmp.ne.s32.totalorder %s159, %s162
      %p168 = scmp.eq.s32.totalorder %s18, 0
      %p169 = por %p167, %p168
      %p170 = scmp.ne.s32.totalorder %s159, %s162
      %p171 = scmp.eq.s32.totalorder %s23, 1
      %p172 = por %p170, %p171
      %p173 = scmp.ne.s32.totalorder %s162, %s163
      %p174 = scmp.eq.s32.totalorder %s23, 0
      %p175 = por %p173, %p174
      %p176 = scmp.ne.s32.totalorder %s162, %s163
      %p177 = scmp.eq.s32.totalorder %s24, 1
      %p178 = por %p176, %p177
      %p180 = scmp.ne.s32.totalorder %s163, %s179
      %p181 = scmp.eq.s32.totalorder %s24, 0
      %p182 = por %p180, %p181
      %p183 = scmp.le.s32.totalorder 1, %s18
      %p184 = scmp.lt.s32.totalorder %s18, 3
      %p185 = pnand %p183, %p184
      %p186 = pneg %p185
      // Predicated region
      $region9: #{tpu_custom_call.1} parent=5 // pred_check
        _
      $region10: #{tpu_custom_call.1} parent=5 // pred_check_branch
        %188 = sbr.rel (%p185) target = $region12
      $region11: #{tpu_custom_call.1} parent=5 // pred_region
        %s189 = ssub.s32 %s18, 1
        // Predicated region
        $region13: #{tpu_custom_call.1} parent=11 // pred_check
          %p190 = pneg %p65
        $region14: #{tpu_custom_call.1} parent=11 // pred_check_branch
          %192 = sbr.rel (%p190) target = $region16
        $region15: #{tpu_custom_call.1} parent=11 // pred_region
          _
        $region16: #{tpu_custom_call.1} parent=11 // pred_fallthru
          _
        // Predicated region
        $region17: #{tpu_custom_call.1} parent=11 // pred_check
          %p193 = pneg %p86
        $region18: #{tpu_custom_call.1} parent=11 // pred_check_branch
          %195 = sbr.rel (%p193) target = $region20
        $region19: #{tpu_custom_call.1} parent=11 // pred_region
          _
        $region20: #{tpu_custom_call.1} parent=11 // pred_fallthru
          _
        // Predicated region
        $region21: #{tpu_custom_call.1} parent=11 // pred_check
          %p196 = pneg %p107
        $region22: #{tpu_custom_call.1} parent=11 // pred_check_branch
          %198 = sbr.rel (%p196) target = $region24
        $region23: #{tpu_custom_call.1} parent=11 // pred_region
          _
        $region24: #{tpu_custom_call.1} parent=11 // pred_fallthru
          _
        // Predicated region
        $region25: #{tpu_custom_call.1} parent=11 // pred_check
          %p199 = pneg %p128
        $region26: #{tpu_custom_call.1} parent=11 // pred_check_branch
          %201 = sbr.rel (%p199) target = $region28
        $region27: #{tpu_custom_call.1} parent=11 // pred_region
          _
        $region28: #{tpu_custom_call.1} parent=11 // pred_fallthru
          _
        // Predicated region
        $region29: #{tpu_custom_call.1} parent=11 // pred_check
          %p202 = pneg %p149
        $region30: #{tpu_custom_call.1} parent=11 // pred_check_branch
          %204 = sbr.rel (%p202) target = $region32
        $region31: #{tpu_custom_call.1} parent=11 // pred_region
          _
        $region32: #{tpu_custom_call.1} parent=11 // pred_fallthru
          _
      $region12: #{tpu_custom_call.1} parent=5 // pred_fallthru
        _
      %p205 = scmp.lt.s32.totalorder %s18, 2
      // Predicated region
      $region33: #{tpu_custom_call.1} parent=5 // pred_check
        %p206 = pneg %p205
      $region34: #{tpu_custom_call.1} parent=5 // pred_check_branch
        %208 = sbr.rel (%p206) target = $region36
      $region35: #{tpu_custom_call.1} parent=5 // pred_region
        // Predicated region
        $region37: #{tpu_custom_call.1} parent=35 // pred_check
          %p209 = pneg %p38
        $region38: #{tpu_custom_call.1} parent=35 // pred_check_branch
          %211 = sbr.rel (%p209) target = $region40
        $region39: #{tpu_custom_call.1} parent=35 // pred_region
          %s212 = sand.u32 %s28, 1
          %s213 = scalar_lea.sflag [#allocation3], %s212
          %s214 = sand.u32 %s28, 1
          %s215 = smul.addr %s214, 32
          %s216 = scalar_lea.vmem [#allocation2], %s215
          %s218 = ssub.s32 512, 512
          %219 = vsyncadd %s213, %s218
          %s220 = smul.addr %s18, 4
          %s221 = smul.addr %s220, 128
          %s222 = scalar_lea.hbm %s0, %s221
          %s223 = sshll.u32 %s216, 4
          %s224 = int_to_ptr.vmem [resolvable:$true] %s223
          %229 = dma.hbm_to_vmem [thread:$0]  %s222, 512, %s224, %s213, 256, 256, 16
        $region40: #{tpu_custom_call.1} parent=35 // pred_fallthru
          _
      $region36: #{tpu_custom_call.1} parent=5 // pred_fallthru
        _
      %p230 = scmp.le.s32.totalorder 1, %s18
      %p231 = scmp.lt.s32.totalorder %s18, 3
      %p232 = pnand %p230, %p231
      %p233 = pneg %p232
      // Predicated region
      $region41: #{tpu_custom_call.1} parent=5 // pred_check
        _
      $region42: #{tpu_custom_call.1} parent=5 // pred_check_branch
        %235 = sbr.rel (%p232) target = $region44
      $region43: #{tpu_custom_call.1} parent=5 // pred_region
        %s236 = ssub.s32 %s18, 1
        %s237 = sand.u32 %s31, 1
        %s238 = scalar_lea.sflag [#allocation3], %s237
        %s239 = sand.u32 %s31, 1
        %s240 = smul.addr %s239, 32
        %s241 = scalar_lea.vmem [#allocation2], %s240
        // Predicated region
        $region45: #{tpu_custom_call.1} parent=43 // pred_check
          %p242 = pneg %p44
        $region46: #{tpu_custom_call.1} parent=43 // pred_check_branch
          %244 = sbr.rel (%p242) target = $region48
        $region47: #{tpu_custom_call.1} parent=43 // pred_region
          %245 = dma.done %s238, 512
        $region48: #{tpu_custom_call.1} parent=43 // pred_fallthru
          _
        %s246 = sand.u32 %s31, 1
        %s247 = scalar_lea.sflag [#allocation3], %s246
        %s248 = sand.u32 %s31, 1
        %s249 = smul.addr %s248, 32
        %s250 = scalar_lea.vmem [#allocation2], %s249
        %p251 = pneg %p44
        %p252 = pneg %p41
        %p253 = pneg %p65
        %p254 = pneg %p62
        %p255 = pneg %p86
        %p256 = pneg %p83
        %p257 = pneg %p107
        %p258 = pneg %p104
        %p259 = pneg %p128
        %p260 = pneg %p125
        %p261 = pneg %p149
        %p262 = pneg %p146
        %p263 = pneg %p175
        %p264 = pneg %p172
        %s265 = sand.u32 %s162, 1
        %s266 = scalar_lea.sflag [#allocation4], %s265
        %s267 = sand.u32 %s162, 1
        %s268 = smul.addr %s267, 32
        %s269 = scalar_lea.vmem [#allocation5], %s268
        %v270 = vld [vmem:[%s241] sm:$0xff]
        %v271 = vld [vmem:[%s241 + $0x8] sm:$0xff]
        %v272 = vld [vmem:[%s241 + $0x10] sm:$0xff]
        %v273 = vld [vmem:[%s241 + $0x18] sm:$0xff]
        %v274 = vld [vmem:[%s1] sm:$0x1]
        %vm275 = vcmask 130048
        %v277 = vsel %vm275, %v274, 0
        %279 = vmatprep.subr.mxu0 %v271
        %280 = vmatpush1.msra.mxu0 %v270
        %281 = vmatprep.subr.mxu0 %v273
        %282 = vmatpush1.msra.mxu0 %v272
        %283 = vmatprep.subr.mxu0 0.0
        %284 = vmatpush1.msra.mxu0 0.0
        %285 = vmatprep.subr.mxu0 0.0
        %286 = vmatpush1.msra.mxu0 0.0
        %287 = vmatprep.subr.mxu0 0.0
        %288 = vmatpush1.msra.mxu0 0.0
        %289 = vmatprep.subr.mxu0 0.0
        %290 = vmatpush1.msra.mxu0 0.0
        %291 = vmatprep.subr.mxu0 0.0
        %292 = vmatpush1.msra.mxu0 0.0
        %293 = vmatprep.subr.mxu0 0.0
        %294 = vmatpush1.msra.mxu0 0.0
        %295 = vmatprep.subr.mxu0 0.0
        %296 = vmatpush1.msra.mxu0 0.0
        %297 = vmatprep.subr.mxu0 0.0
        %298 = vmatpush1.msra.mxu0 0.0
        %299 = vmatprep.subr.mxu0 0.0
        %300 = vmatpush1.msra.mxu0 0.0
        %301 = vmatprep.subr.mxu0 0.0
        %302 = vmatpush1.msra.mxu0 0.0
        %303 = vmatprep.subr.mxu0 0.0
        %304 = vmatpush1.msra.mxu0 0.0
        %305 = vmatprep.subr.mxu0 0.0
        %306 = vmatpush1.msra.mxu0 0.0
        %307 = vmatprep.subr.mxu0 0.0
        %308 = vmatpush1.msra.mxu0 0.0
        %309 = vmatprep.subr.mxu0 0.0
        %310 = vmatpush1.msra.mxu0 0.0
        %311 = vmatprep.subr.mxu0 0.0
        %312 = vmatpush1.msra.mxu0 0.0
        %313 = vmatprep.subr.mxu0 0.0
        %314 = vmatpush1.msra.mxu0 0.0
        %315 = vmatprep.subr.mxu0 0.0
        %316 = vmatpush1.msra.mxu0 0.0
        %317 = vmatprep.subr.mxu0 0.0
        %318 = vmatpush1.msra.mxu0 0.0
        %319 = vmatprep.subr.mxu0 0.0
        %320 = vmatpush1.msra.mxu0 0.0
        %321 = vmatprep.subr.mxu0 0.0
        %322 = vmatpush1.msra.mxu0 0.0
        %323 = vmatprep.subr.mxu0 0.0
        %324 = vmatpush1.msra.mxu0 0.0
        %325 = vmatprep.subr.mxu0 0.0
        %326 = vmatpush1.msra.mxu0 0.0
        %327 = vmatprep.subr.mxu0 0.0
        %328 = vmatpush1.msra.mxu0 0.0
        %329 = vmatprep.subr.mxu0 0.0
        %330 = vmatpush1.msra.mxu0 0.0
        %331 = vmatprep.subr.mxu0 0.0
        %332 = vmatpush1.msra.mxu0 0.0
        %333 = vmatprep.subr.mxu0 0.0
        %334 = vmatpush1.msra.mxu0 0.0
        %335 = vmatprep.subr.mxu0 0.0
        %336 = vmatpush1.msra.mxu0 0.0
        %337 = vmatprep.subr.mxu0 0.0
        %338 = vmatpush1.msra.mxu0 0.0
        %339 = vmatprep.subr.mxu0 0.0
        %340 = vmatpush1.msra.mxu0 0.0
        %341 = vmatprep.subr.mxu0 0.0
        %342 = vmatpush1.msra.mxu0 0.0
        %343 = vmatprep.mubr.f32.mxu0 0.0
        %344 = vmatmul.mubr.f32.gmra.mrb[0].mxu0 %v277
        %v345 = vpop.f32.mrb[0].mxu0
        %v346 = vadd.f32 0.0, %v345
        %v347 = vpop.f32.mrb[0].mxu0
        %v348 = vadd.f32 0.0, %v347
        %349 = vdwg.mxu0
        %vm350 = vcmask 1040384
        %v351 = vsel %vm350, %v346, -inf
        %v352 = vsel %vm350, %v348, -inf
        %v353 = vmax.f32 %v351, %v352
        %354 = vmax.xlane.f32.xlu0 %v353
        %v355 = vpop.xlane.xlu0 %354
        %v356 = vsub.f32 %v346, %v355
        %v357 = vsub.f32 %v348, %v355
        %v358 = vmul.f32 %v356, 1.442695
        %v359 = vpow.pop %v358
        %v360 = vmul.f32 %v357, 1.442695
        %v361 = vpow.pop %v360
        %v362 = vsel %vm350, %v359, 0.0
        %v363 = vsel %vm350, %v361, 0.0
        %v364 = vadd.f32 %v362, %v363
        %365 = vadd.xlane.f32.xlu0 %v364
        %v366 = vpop.xlane.xlu0 %365
        %v367 = vlaneseq
        %v368 = vshrl.u32 %v367, 7
        %v369 = vsub.s32 0, %v368
        %v370 = vrot.slane %v359, %v369
        %v371 = vlaneseq
        %v372 = vshrl.u32 %v371, 7
        %v373 = vsub.s32 0, %v372
        %v374 = vrot.slane %v361, %v373
        %v375 = vmul.f32 %v270, %v370
        %v376 = vmul.f32 %v271, %v374
        %v377 = vmul.f32 %v272, %v370
        %v378 = vmul.f32 %v273, %v374
        %v379 = vadd.f32 %v375, %v376
        %380 = vadd.xlane.f32.xlu0 %v379
        %v381 = vpop.xlane.xlu0 %380
        %v382 = vadd.f32 %v377, %v378
        %383 = vadd.xlane.f32.xlu0 %v382
        %v384 = vpop.xlane.xlu0 %383
        %v385 = vrcp.pop %v366
        %v386 = vlaneseq
        %v387 = vshrl.u32 %v386, 7
        %v388 = vsub.s32 0, %v387
        %v389 = vrot.slane %v385, %v388
        %v390 = vmul.f32 %v381, %v389
        %v391 = vmul.f32 %v384, %v389
        %v392 = vld [vmem:[%s3] sm:$0x1]
        %v393 = vld [vmem:[%s3 + $0x1] sm:$0x1]
        %v394 = vld [vmem:[%s3 + $0x2] sm:$0x1]
        %v395 = vld [vmem:[%s2] sm:$0xff]
        %v396 = vld [vmem:[%s2 + $0x8] sm:$0xff]
        %v399 = vlaneseq
        %v400 = vand.u32 %v399, 127
        %v401 = vlaneseq
        %v402 = vshrl.u32 %v401, 7
        %v403 = vsub.s32 %v400, %v402
        %v404 = vrot.slane %v390, %v403
        %v405 = vadd.s32 %v400, 4294967288
        %v406 = vlaneseq
        %v407 = vshrl.u32 %v406, 7
        %v408 = vsub.s32 %v405, %v407
        %v409 = vrot.slane %v391, %v408
        %vm410 = vcmask 130112
        %v411 = vsel %vm410, %v409, %v404
        %v412 = vsel %vm275, %v411, 0
        %414 = vmatprep.subr.mxu0 0.0
        %415 = vmatpush1.msra.mxu0 %v395
        %416 = vmatprep.subr.mxu0 0.0
        %417 = vmatpush1.msra.mxu0 %v396
        %418 = vmatprep.subr.mxu0 0.0
        %419 = vmatpush1.msra.mxu0 0.0
        %420 = vmatprep.subr.mxu0 0.0
        %421 = vmatpush1.msra.mxu0 0.0
        %422 = vmatprep.subr.mxu0 0.0
        %423 = vmatpush1.msra.mxu0 0.0
        %424 = vmatprep.subr.mxu0 0.0
        %425 = vmatpush1.msra.mxu0 0.0
        %426 = vmatprep.subr.mxu0 0.0
        %427 = vmatpush1.msra.mxu0 0.0
        %428 = vmatprep.subr.mxu0 0.0
        %429 = vmatpush1.msra.mxu0 0.0
        %430 = vmatprep.subr.mxu0 0.0
        %431 = vmatpush1.msra.mxu0 0.0
        %432 = vmatprep.subr.mxu0 0.0
        %433 = vmatpush1.msra.mxu0 0.0
        %434 = vmatprep.subr.mxu0 0.0
        %435 = vmatpush1.msra.mxu0 0.0
        %436 = vmatprep.subr.mxu0 0.0
        %437 = vmatpush1.msra.mxu0 0.0
        %438 = vmatprep.subr.mxu0 0.0
        %439 = vmatpush1.msra.mxu0 0.0
        %440 = vmatprep.subr.mxu0 0.0
        %441 = vmatpush1.msra.mxu0 0.0
        %442 = vmatprep.subr.mxu0 0.0
        %443 = vmatpush1.msra.mxu0 0.0
        %444 = vmatprep.subr.mxu0 0.0
        %445 = vmatpush1.msra.mxu0 0.0
        %446 = vmatprep.subr.mxu0 0.0
        %447 = vmatpush1.msra.mxu0 0.0
        %448 = vmatprep.subr.mxu0 0.0
        %449 = vmatpush1.msra.mxu0 0.0
        %450 = vmatprep.subr.mxu0 0.0
        %451 = vmatpush1.msra.mxu0 0.0
        %452 = vmatprep.subr.mxu0 0.0
        %453 = vmatpush1.msra.mxu0 0.0
        %454 = vmatprep.subr.mxu0 0.0
        %455 = vmatpush1.msra.mxu0 0.0
        %456 = vmatprep.subr.mxu0 0.0
        %457 = vmatpush1.msra.mxu0 0.0
        %458 = vmatprep.subr.mxu0 0.0
        %459 = vmatpush1.msra.mxu0 0.0
        %460 = vmatprep.subr.mxu0 0.0
        %461 = vmatpush1.msra.mxu0 0.0
        %462 = vmatprep.subr.mxu0 0.0
        %463 = vmatpush1.msra.mxu0 0.0
        %464 = vmatprep.subr.mxu0 0.0
        %465 = vmatpush1.msra.mxu0 0.0
        %466 = vmatprep.subr.mxu0 0.0
        %467 = vmatpush1.msra.mxu0 0.0
        %468 = vmatprep.subr.mxu0 0.0
        %469 = vmatpush1.msra.mxu0 0.0
        %470 = vmatprep.subr.mxu0 0.0
        %471 = vmatpush1.msra.mxu0 0.0
        %472 = vmatprep.subr.mxu0 0.0
        %473 = vmatpush1.msra.mxu0 0.0
        %474 = vmatprep.subr.mxu0 0.0
        %475 = vmatpush1.msra.mxu0 0.0
        %476 = vmatprep.subr.mxu0 0.0
        %477 = vmatpush1.msra.mxu0 0.0
        %478 = vmatprep.mubr.f32.mxu0 0.0
        %479 = vmatmul.mubr.f32.gmra.mrb[0].mxu0 %v412
        %v480 = vpop.f32.mrb[0].mxu0
        %v481 = vadd.f32 %v392, %v480
        %v482 = vpop.f32.mrb[0].mxu0
        %483 = vdwg.mxu0
        %vm484 = vcmask 24576
        %v485 = vsel %vm484, %v481, 0.0
        %486 = vadd.xlane.f32.xlu0 %v485
        %v487 = vpop.xlane.xlu0 %486
        %v488 = vrcp.pop 4.0
        %v489 = vmul.f32 %v487, %v488
        %v490 = vsub.f32 %v481, %v489
        %v491 = vmul.f32 %v490, %v490
        %v492 = vsel %vm484, %v491, 0.0
        %493 = vadd.xlane.f32.xlu0 %v492
        %v494 = vpop.xlane.xlu0 %493
        %v495 = vmul.f32 %v494, %v488
        %v496 = vadd.f32 %v495, 1e-05
        %v497 = vrsqrt.pop %v496
        %v498 = vmul.f32 %v490, %v497
        %v499 = vmul.f32 %v498, %v393
        %v500 = vadd.f32 %v499, %v394
        %v501 = vmax.f32 %v500, 0.0
        %v502 = vld [vmem:[%s4] sm:$0xf]
        %v503 = vld [vmem:[%s5] sm:$0x1]
        %vm504 = vcmask 31744
        %v506 = vsel %vm504, %v501, 0
        %vm508 = vcmask 1043456
        %v510 = vsel %vm508, %v502, 0
        %512 = vmatprep.subr.mxu0 0.0
        %513 = vmatpush1.msra.mxu0 %v510
        %514 = vmatprep.subr.mxu0 0.0
        %515 = vmatpush1.msra.mxu0 0.0
        %516 = vmatprep.subr.mxu0 0.0
        %517 = vmatpush1.msra.mxu0 0.0
        %518 = vmatprep.subr.mxu0 0.0
        %519 = vmatpush1.msra.mxu0 0.0
        %520 = vmatprep.subr.mxu0 0.0
        %521 = vmatpush1.msra.mxu0 0.0
        %522 = vmatprep.subr.mxu0 0.0
        %523 = vmatpush1.msra.mxu0 0.0
        %524 = vmatprep.subr.mxu0 0.0
        %525 = vmatpush1.msra.mxu0 0.0
        %526 = vmatprep.subr.mxu0 0.0
        %527 = vmatpush1.msra.mxu0 0.0
        %528 = vmatprep.subr.mxu0 0.0
        %529 = vmatpush1.msra.mxu0 0.0
        %530 = vmatprep.subr.mxu0 0.0
        %531 = vmatpush1.msra.mxu0 0.0
        %532 = vmatprep.subr.mxu0 0.0
        %533 = vmatpush1.msra.mxu0 0.0
        %534 = vmatprep.subr.mxu0 0.0
        %535 = vmatpush1.msra.mxu0 0.0
        %536 = vmatprep.subr.mxu0 0.0
        %537 = vmatpush1.msra.mxu0 0.0
        %538 = vmatprep.subr.mxu0 0.0
        %539 = vmatpush1.msra.mxu0 0.0
        %540 = vmatprep.subr.mxu0 0.0
        %541 = vmatpush1.msra.mxu0 0.0
        %542 = vmatprep.subr.mxu0 0.0
        %543 = vmatpush1.msra.mxu0 0.0
        %544 = vmatprep.subr.mxu0 0.0
        %545 = vmatpush1.msra.mxu0 0.0
        %546 = vmatprep.subr.mxu0 0.0
        %547 = vmatpush1.msra.mxu0 0.0
        %548 = vmatprep.subr.mxu0 0.0
        %549 = vmatpush1.msra.mxu0 0.0
        %550 = vmatprep.subr.mxu0 0.0
        %551 = vmatpush1.msra.mxu0 0.0
        %552 = vmatprep.subr.mxu0 0.0
        %553 = vmatpush1.msra.mxu0 0.0
        %554 = vmatprep.subr.mxu0 0.0
        %555 = vmatpush1.msra.mxu0 0.0
        %556 = vmatprep.subr.mxu0 0.0
        %557 = vmatpush1.msra.mxu0 0.0
        %558 = vmatprep.subr.mxu0 0.0
        %559 = vmatpush1.msra.mxu0 0.0
        %560 = vmatprep.subr.mxu0 0.0
        %561 = vmatpush1.msra.mxu0 0.0
        %562 = vmatprep.subr.mxu0 0.0
        %563 = vmatpush1.msra.mxu0 0.0
        %564 = vmatprep.subr.mxu0 0.0
        %565 = vmatpush1.msra.mxu0 0.0
        %566 = vmatprep.subr.mxu0 0.0
        %567 = vmatpush1.msra.mxu0 0.0
        %568 = vmatprep.subr.mxu0 0.0
        %569 = vmatpush1.msra.mxu0 0.0
        %570 = vmatprep.subr.mxu0 0.0
        %571 = vmatpush1.msra.mxu0 0.0
        %572 = vmatprep.subr.mxu0 0.0
        %573 = vmatpush1.msra.mxu0 0.0
        %574 = vmatprep.subr.mxu0 0.0
        %575 = vmatpush1.msra.mxu0 0.0
        %576 = vmatprep.mubr.f32.mxu0 0.0
        %577 = vmatmul.mubr.f32.gmra.mrb[0].mxu0 %v506
        %v578 = vpop.f32.mrb[0].mxu0
        %v579 = vadd.f32 %v503, %v578
        %v580 = vpop.f32.mrb[0].mxu0
        %581 = vdwg.mxu0
        %v582 = vlaneseq
        %v583 = vshrl.u32 %v582, 7
        %v584 = vsub.s32 0, %v583
        %v585 = vrot.slane %v579, %v584
        %587 = vbcast.lane.b32.xlu0 %v585, 256
        %v588 = vpop.permute.xlu0 %587
        %s590 = sor.u32 256, 8
        %591 = vbcast.lane.b32.xlu0 %v585, %s590
        %v592 = vpop.permute.xlu0 %591
        %v593 = vadd.f32 %v270, %v588
        %v594 = vadd.f32 %v271, %v588
        %v595 = vadd.f32 %v272, %v592
        %v596 = vadd.f32 %v273, %v592
        %597 = vst [vmem:[%s269] sm:$0xff] %v593
        %598 = vst [vmem:[%s269 + $0x8] sm:$0xff] %v594
        %599 = vst [vmem:[%s269 + $0x10] sm:$0xff] %v595
        %600 = vst [vmem:[%s269 + $0x18] sm:$0xff] %v596
        %s601 = sand.u32 %s162, 1
        %s602 = scalar_lea.sflag [#allocation4], %s601
        %s603 = sand.u32 %s162, 1
        %s604 = smul.addr %s603, 32
        %s605 = scalar_lea.vmem [#allocation5], %s604
        // Predicated region
        $region49: #{tpu_custom_call.1} parent=43 // pred_check
          %p606 = pneg %p172
        $region50: #{tpu_custom_call.1} parent=43 // pred_check_branch
          %608 = sbr.rel (%p606) target = $region52
        $region51: #{tpu_custom_call.1} parent=43 // pred_region
          %s610 = ssub.s32 512, 512
          %611 = vsyncadd %s602, %s610
          %s612 = smul.addr %s23, 4
          %s613 = smul.addr %s612, 128
          %s614 = scalar_lea.hbm %s6, %s613
          %s615 = sshll.u32 %s605, 4
          %s616 = int_to_ptr.vmem [resolvable:$true] %s615
          %621 = dma.vmem_to_hbm [thread:$0]  %s616, 512, %s614, %s602, 256, 256, 16
        $region52: #{tpu_custom_call.1} parent=43 // pred_fallthru
          _
      $region44: #{tpu_custom_call.1} parent=5 // pred_fallthru
        _
      %p622 = scmp.le.s32.totalorder 2, %s18
      // Predicated region
      $region53: #{tpu_custom_call.1} parent=5 // pred_check
        %p623 = pneg %p622
      $region54: #{tpu_custom_call.1} parent=5 // pred_check_branch
        %625 = sbr.rel (%p623) target = $region56
      $region55: #{tpu_custom_call.1} parent=5 // pred_region
        %s626 = ssub.s32 %s18, 2
        // Predicated region
        $region57: #{tpu_custom_call.1} parent=55 // pred_check
          %p627 = pneg %p178
        $region58: #{tpu_custom_call.1} parent=55 // pred_check_branch
          %629 = sbr.rel (%p627) target = $region60
        $region59: #{tpu_custom_call.1} parent=55 // pred_region
          %s630 = sand.u32 %s163, 1
          %s631 = scalar_lea.sflag [#allocation4], %s630
          %s632 = sand.u32 %s163, 1
          %s633 = smul.addr %s632, 32
          %s634 = scalar_lea.vmem [#allocation5], %s633
          %635 = dma.done %s631, 512
        $region60: #{tpu_custom_call.1} parent=55 // pred_fallthru
          _
      $region56: #{tpu_custom_call.1} parent=5 // pred_fallthru
        _
    $region6: #{tpu_custom_call.1} parent=1 // loop_footer
      %s22 = sadd.s32 1, %s18
    $region7: #{tpu_custom_call.1} parent=1 // loop_footer_branch
      %17 = sbr.rel target = $region3
    $region8: #{tpu_custom_call.1} parent=1 // loop_exit
      _
    %636 = vsyncpa [#allocation3], 1
    %s637 = scalar_lea.sflag [#allocation3], 1
    %638 = vsyncpa %s637, 1
    %639 = vsyncpa [#allocation4], 1
    %s640 = scalar_lea.sflag [#allocation4], 1
    %641 = vsyncpa %s640, 1

</llo_original>
